<compile_context>
chip_gen: v5e
topology: v5e:2x2
jax: 0.10.0
libtpu: 0.0.40
codegen_flags: <defaults>
</compile_context>

<pallas_src>
import math

import jax
import jax.numpy as jnp
from jax.experimental import pallas as pl
from jax.experimental.pallas import tpu as pltpu


def gcn_kernel(x_ref, a_ref, w_ref, b_ref, o_ref):
    """One grid step = Bt graphs, pre-flattened into an R = Bt*n row slab.

    x_ref : (R, f)    node features for this block of graphs (flattened)
    a_ref : (R, R)    block-diagonal adjacency for this block of graphs
    w_ref : (f, Dp)   Linear weight, transposed, lane-padded to Dp (bf16)
    b_ref : (1, Dp)   Linear bias, lane-padded (f32)
    o_ref : (R, Dp)   output slab (f32)
    """
    # Neighborhood aggregation: one MXU pass. The block-diagonal layout keeps
    # graphs independent, so this equals the per-graph adj @ x.
    agg = jnp.dot(a_ref[...], x_ref[...], preferred_element_type=jnp.float32)
    # Dense projection + bias: second MXU pass, f32 accumulation.
    out = jnp.dot(agg.astype(w_ref.dtype), w_ref[...],
                  preferred_element_type=jnp.float32)
    o_ref[...] = (out + b_ref[...]).astype(o_ref.dtype)


def gcn_layer(x, adj, W, bias, *, target_rows_per_step=128,
              compute_dtype=jnp.bfloat16):
    """x: (b, n, f); adj: (b, n, n); W: (D, f) (PyTorch layout); bias: (D,)."""
    b, n, f = x.shape
    D = W.shape[0]

    # ---- choose graphs per grid step (Bt) --------------------------------
    Bt = max(1, target_rows_per_step // n)        # ~128 rows per MXU pass
    if b <= Bt:
        # Tiny batch: still split into >=2 steps so both v7x TCs get work.
        Bt = max(1, -(-b // 2))
    # Bt*n must be a multiple of 8 (sublane) when it is not the full extent.
    step_mult = 8 // math.gcd(n, 8)
    Bt = -(-Bt // step_mult) * step_mult

    pad = (-b) % Bt
    bp = b + pad
    steps = bp // Bt
    R = Bt * n

    if pad:
        # Zero-padded graphs aggregate to zero (bias-only rows), sliced off.
        x = jnp.pad(x, ((0, pad), (0, 0), (0, 0)))
        adj = jnp.pad(adj, ((0, pad), (0, 0), (0, 0)))

    # ---- wrapper-side layout work (free vs. in-kernel relayouts) ----------
    # Flattened node features: (bp*n, f).
    x_flat = x.reshape(bp * n, f).astype(compute_dtype)

    # Per-step block-diagonal adjacency, row-stacked: (steps*R, R).
    # bd[s, g*n+p, h*n+q] = adj[s*Bt+g, p, q] if g == h else 0  -> no leakage
    # between graphs (padding rows stay zero).
    adj_g = adj.reshape(steps, Bt, n, n).astype(compute_dtype)
    eye_bt = jnp.eye(Bt, dtype=compute_dtype)
    adj_bd = jnp.einsum("sgpq,gh->sgphq", adj_g, eye_bt).reshape(steps * R, R)

    # Lane-dense projection: pad output features to a multiple of 128 lanes.
    Dp = -(-D // 128) * 128
    W_t = jnp.zeros((f, Dp), compute_dtype).at[:, :D].set(
        W.T.astype(compute_dtype))
    bias_p = jnp.zeros((1, Dp), jnp.float32).at[:, :D].set(
        bias.astype(jnp.float32))

    out = pl.pallas_call(
        gcn_kernel,
        out_shape=jax.ShapeDtypeStruct((bp * n, Dp), jnp.float32),
        grid=(steps,),
        in_specs=[
            pl.BlockSpec((R, f), lambda i: (i, 0)),     # streamed
            pl.BlockSpec((R, R), lambda i: (i, 0)),     # streamed
            pl.BlockSpec((f, Dp), lambda i: (0, 0)),    # resident weight
            pl.BlockSpec((1, Dp), lambda i: (0, 0)),    # resident bias
        ],
        out_specs=pl.BlockSpec((R, Dp), lambda i: (i, 0)),
        compiler_params=pltpu.CompilerParams(
            dimension_semantics=("parallel",),
        ),
    )(x_flat, adj_bd, W_t, bias_p)

    return out[: b * n, :D].reshape(b, n, D)


def gcn_reference(x, adj, W, bias):
    """Pure-JAX replica of the PyTorch forward (f32, highest precision)."""
    agg = jnp.einsum("bij,bjf->bif", adj, x,
                     precision=jax.lax.Precision.HIGHEST)
    return jnp.einsum("bnf,Df->bnD", agg, W,
                      precision=jax.lax.Precision.HIGHEST) + bias[None, None, :]


if __name__ == "__main__":
    # Small deterministic problem: b=8 graphs, n=8 nodes, in=16, out=32.
    b, n, in_dim, out_dim = 8, 8, 16, 32

    key = jax.random.PRNGKey(0)
    k_x, k_a, k_w, k_b = jax.random.split(key, 4)

    X = jax.random.normal(k_x, (b, n, in_dim), dtype=jnp.float32)

    # 0/1 adjacency with self-loops, row-normalized (typical GCN preprocessing;
    # the kernel handles any float adjacency).
    A = (jax.random.uniform(k_a, (b, n, n)) > 0.5).astype(jnp.float32)
    A = jnp.maximum(A, jnp.eye(n, dtype=jnp.float32)[None, :, :])
    A = A / jnp.sum(A, axis=-1, keepdims=True)

    # Parameters initialized like nn.Linear (uniform +- 1/sqrt(fan_in)).
    bound = 1.0 / (in_dim ** 0.5)
    W = jax.random.uniform(k_w, (out_dim, in_dim), jnp.float32, -bound, bound)
    bias = jax.random.uniform(k_b, (out_dim,), jnp.float32, -bound, bound)

    out = gcn_layer(X, A, W, bias)
    out = jax.block_until_ready(out)

    ref = gcn_reference(X, A, W, bias)
    assert out.shape == (b, n, out_dim)
    # bf16 MXU operands (f32 accumulation) vs. f32 reference -> bf16 tolerance.
    assert jnp.allclose(out, ref, atol=3e-2, rtol=3e-2), "mismatch vs reference"

    print("KERNEL_OK")
</pallas_src>

<mosaic_0001>
module attributes {stable_mosaic.version = 11 : i64} {
  func.func @gcn_kernel(%arg0: i32, %arg1: memref<32x16xbf16, #tpu.memory_space<vmem>>, %arg2: memref<32x32xbf16, #tpu.memory_space<vmem>>, %arg3: memref<16x128xbf16, #tpu.memory_space<vmem>>, %arg4: memref<1x128xf32, #tpu.memory_space<vmem>>, %arg5: memref<32x128xf32, #tpu.memory_space<vmem>>) attributes {dimension_semantics = [#tpu.dimension_semantics<parallel>], iteration_bounds = array<i64: 2>, scalar_prefetch = 0 : i64, scratch_operands = 0 : i64, tpu.core_type = #tpu.core_type<tc>, window_params = [{transform_indices = @transform_0, window_bounds = array<i64: 32, 16>}, {transform_indices = @transform_1, window_bounds = array<i64: 32, 32>}, {pipeline_mode = #tpu.pipeline_mode<synchronous>, transform_indices = @transform_2, window_bounds = array<i64: 16, 128>}, {pipeline_mode = #tpu.pipeline_mode<synchronous>, transform_indices = @transform_3, window_bounds = array<i64: 1, 128>}, {transform_indices = @transform_4, window_bounds = array<i64: 32, 128>}]} {
    %c0 = arith.constant 0 : index
    %c0_0 = arith.constant 0 : index
    %0 = vector.load %arg2[%c0, %c0_0] : memref<32x32xbf16, #tpu.memory_space<vmem>>, vector<32x32xbf16>
    %c0_1 = arith.constant 0 : index
    %c0_2 = arith.constant 0 : index
    %1 = vector.load %arg1[%c0_1, %c0_2] : memref<32x16xbf16, #tpu.memory_space<vmem>>, vector<32x16xbf16>
    %cst = arith.constant dense<0.000000e+00> : vector<32x16xf32>
    %2 = tpu.matmul %0, %1, %cst {dimension_numbers = #tpu.dot_dimension_numbers<[1], [0], [0], [1], [0, 0, 1, 1], [], []>} : vector<32x32xbf16>, vector<32x16xbf16>, vector<32x16xf32> -> vector<32x16xf32>
    %3 = arith.truncf %2 : vector<32x16xf32> to vector<32x16xbf16>
    %c0_3 = arith.constant 0 : index
    %c0_4 = arith.constant 0 : index
    %4 = vector.load %arg3[%c0_3, %c0_4] : memref<16x128xbf16, #tpu.memory_space<vmem>>, vector<16x128xbf16>
    %cst_5 = arith.constant dense<0.000000e+00> : vector<32x128xf32>
    %5 = tpu.matmul %3, %4, %cst_5 {dimension_numbers = #tpu.dot_dimension_numbers<[1], [0], [0], [1], [0, 0, 1, 1], [], []>} : vector<32x16xbf16>, vector<16x128xbf16>, vector<32x128xf32> -> vector<32x128xf32>
    %c0_6 = arith.constant 0 : index
    %c0_7 = arith.constant 0 : index
    %6 = vector.load %arg4[%c0_6, %c0_7] : memref<1x128xf32, #tpu.memory_space<vmem>>, vector<1x128xf32>
    %7 = vector.broadcast %6 : vector<1x128xf32> to vector<32x128xf32>
    %8 = arith.addf %5, %7 : vector<32x128xf32>
    %c0_8 = arith.constant 0 : index
    %c0_9 = arith.constant 0 : index
    %9 = vector.load %arg5[%c0_8, %c0_9] : memref<32x128xf32, #tpu.memory_space<vmem>>, vector<32x128xf32>
    tpu.vector_store %arg5[%c0_8, %c0_9], %8 {strides = array<i32>} : memref<32x128xf32, #tpu.memory_space<vmem>>, vector<32x128xf32>,
    return
  }
  func.func @transform_0(%arg0: i32) -> (i32, i32) {
    %c0_i32 = arith.constant 0 : i32
    %c0_i32_0 = arith.constant 0 : i32
    return %arg0, %c0_i32 : i32, i32
  }
  func.func @transform_1(%arg0: i32) -> (i32, i32) {
    %c0_i32 = arith.constant 0 : i32
    %c0_i32_0 = arith.constant 0 : i32
    return %arg0, %c0_i32 : i32, i32
  }
  func.func @transform_2(%arg0: i32) -> (i32, i32) {
    %c0_i32 = arith.constant 0 : i32
    %c0_i32_0 = arith.constant 0 : i32
    %c0_i32_1 = arith.constant 0 : i32
    return %c0_i32, %c0_i32_0 : i32, i32
  }
  func.func @transform_3(%arg0: i32) -> (i32, i32) {
    %c0_i32 = arith.constant 0 : i32
    %c0_i32_0 = arith.constant 0 : i32
    %c0_i32_1 = arith.constant 0 : i32
    return %c0_i32, %c0_i32_0 : i32, i32
  }
  func.func @transform_4(%arg0: i32) -> (i32, i32) {
    %c0_i32 = arith.constant 0 : i32
    %c0_i32_0 = arith.constant 0 : i32
    return %arg0, %c0_i32 : i32, i32
  }
}

</mosaic_0001>

<llo_original>
// kernel: tpu_custom_call.1
$region0: #{tpu_custom_call.1}
  #allocation0 [shape = 'u32[]', space=smem, size = 0x4, offset = 0x4, fixed_abs, tag = 'smem constant byte address 0x4 - core index']
  #allocation1 [shape = 'u32[72,128]{1,0:T(1,128)}', space=vmem, size = 0x9000, scoped, tag = 'internal scratch']
  %s0 = inlined_call_operand.vmem [shape: bf16[64,16], index: 0, kind: input, shape index: {}]
  %s1 = inlined_call_operand.vmem [shape: bf16[64,32], index: 1, kind: input, shape index: {}]
  %s2 = inlined_call_operand.vmem [shape: bf16[16,128], index: 2, kind: input, shape index: {}]
  %s3 = inlined_call_operand.vmem [shape: f32[1,128], index: 3, kind: input, shape index: {}]
  %s4 = inlined_call_operand.hbm [shape: f32[64,128], index: 4, kind: output, shape index: {}]
  %s5 = sld [smem:[#allocation0]]
  $region49: #{tpu_custom_call.1} parent=0
    _
  %s7 = ssub.s32 1, %s5
  %s8 = scalar_select 0, %s7, %s5
  $region1: #{tpu_custom_call.1} parent=0
    #allocation2 [shape = 'u8[32768]{0}', space=vmem, size = 0x8000, scoped, tag = 'output window, operand 0']
    #allocation3 [shape = 's32[2]{0}', space=sflag, size = 0x8, scoped, tag = 'scoped memory for tpu_custom_call.1']
    %9 = vsyncpa [#allocation3], 0
    %s10 = scalar_lea.sflag [#allocation3], 1
    %11 = vsyncpa %s10, 0
    loop: start=0, step=1, limit=4
    $region2: #{tpu_custom_call.1} parent=1 // loop_pre_header
      _
    $region3: #{tpu_custom_call.1} parent=1 // loop_header
      %s13 = sphi 0, %s17
      %p14 = scmp.ge.s32.totalorder %s13, 4
      %s23 = sphi 0, %s25
      %s26 = sphi 0, %s23
      %s27 = sphi 0, %s26
      %s43 = sphi 0, %s27
      %s49 = sphi 0, %s51
      %s52 = sphi 0, %s49
      %s53 = sphi 0, %s52
      %s69 = sphi 0, %s53
      %s73 = sphi 0, %s73
      %s75 = sphi 0, %s73
      %s76 = sphi 0, %s75
      %s90 = sphi 0, %s76
      %s94 = sphi 0, %s94
      %s96 = sphi 0, %s94
      %s97 = sphi 0, %s96
      %s111 = sphi 0, %s97
      %s117 = sphi 0, %s119
      %s120 = sphi 0, %s117
      %s121 = sphi 0, %s120
      %s137 = sphi 0, %s121
    $region4: #{tpu_custom_call.1} parent=1 // loop_header_branch
      %16 = sbr.rel (%p14) target = $region8
    $region5: #{tpu_custom_call.1} parent=1 // loop_body
      %s18 = ssub.s32 %s13, 1
      %s19 = ssub.s32 %s13, 2
      %s20 = sadd.s32 %s13, 1
      %s21 = ssub.s32 %s13, %s20
      %p22 = scmp.eq.s32.totalorder %s21, 0
      %s24 = sadd.s32 %s23, 1
      %s25 = scalar_select %p22, %s23, %s24
      %p28 = pneg %p22
      %p29 = scmp.eq.s32.totalorder %s13, 1
      %p30 = por %p28, %p29
      %p31 = scmp.ne.s32.totalorder %s23, %s26
      %p32 = scmp.eq.s32.totalorder %s13, 0
      %p33 = por %p31, %p32
      %p34 = scmp.ne.s32.totalorder %s23, %s26
      %p35 = scmp.eq.s32.totalorder %s18, 1
      %p36 = por %p34, %p35
      %p37 = scmp.ne.s32.totalorder %s26, %s27
      %p38 = scmp.eq.s32.totalorder %s18, 0
      %p39 = por %p37, %p38
      %p40 = scmp.ne.s32.totalorder %s26, %s27
      %p41 = scmp.eq.s32.totalorder %s19, 1
      %p42 = por %p40, %p41
      %p44 = scmp.ne.s32.totalorder %s27, %s43
      %p45 = scmp.eq.s32.totalorder %s19, 0
      %p46 = por %p44, %p45
      %s47 = ssub.s32 %s13, %s20
      %p48 = scmp.eq.s32.totalorder %s47, 0
      %s50 = sadd.s32 %s49, 1
      %s51 = scalar_select %p48, %s49, %s50
      %p54 = pneg %p48
      %p55 = scmp.eq.s32.totalorder %s13, 1
      %p56 = por %p54, %p55
      %p57 = scmp.ne.s32.totalorder %s49, %s52
      %p58 = scmp.eq.s32.totalorder %s13, 0
      %p59 = por %p57, %p58
      %p60 = scmp.ne.s32.totalorder %s49, %s52
      %p61 = scmp.eq.s32.totalorder %s18, 1
      %p62 = por %p60, %p61
      %p63 = scmp.ne.s32.totalorder %s52, %s53
      %p64 = scmp.eq.s32.totalorder %s18, 0
      %p65 = por %p63, %p64
      %p66 = scmp.ne.s32.totalorder %s52, %s53
      %p67 = scmp.eq.s32.totalorder %s19, 1
      %p68 = por %p66, %p67
      %p70 = scmp.ne.s32.totalorder %s53, %s69
      %p71 = scmp.eq.s32.totalorder %s19, 0
      %p72 = por %p70, %p71
      %s74 = sadd.s32 %s73, 1
      %p77 = scmp.eq.s32.totalorder %s13, 1
      %p78 = scmp.ne.s32.totalorder %s73, %s75
      %p79 = scmp.eq.s32.totalorder %s13, 0
      %p80 = por %p78, %p79
      %p81 = scmp.ne.s32.totalorder %s73, %s75
      %p82 = scmp.eq.s32.totalorder %s18, 1
      %p83 = por %p81, %p82
      %p84 = scmp.ne.s32.totalorder %s75, %s76
      %p85 = scmp.eq.s32.totalorder %s18, 0
      %p86 = por %p84, %p85
      %p87 = scmp.ne.s32.totalorder %s75, %s76
      %p88 = scmp.eq.s32.totalorder %s19, 1
      %p89 = por %p87, %p88
      %p91 = scmp.ne.s32.totalorder %s76, %s90
      %p92 = scmp.eq.s32.totalorder %s19, 0
      %p93 = por %p91, %p92
      %s95 = sadd.s32 %s94, 1
      %p98 = scmp.eq.s32.totalorder %s13, 1
      %p99 = scmp.ne.s32.totalorder %s94, %s96
      %p100 = scmp.eq.s32.totalorder %s13, 0
      %p101 = por %p99, %p100
      %p102 = scmp.ne.s32.totalorder %s94, %s96
      %p103 = scmp.eq.s32.totalorder %s18, 1
      %p104 = por %p102, %p103
      %p105 = scmp.ne.s32.totalorder %s96, %s97
      %p106 = scmp.eq.s32.totalorder %s18, 0
      %p107 = por %p105, %p106
      %p108 = scmp.ne.s32.totalorder %s96, %s97
      %p109 = scmp.eq.s32.totalorder %s19, 1
      %p110 = por %p108, %p109
      %p112 = scmp.ne.s32.totalorder %s97, %s111
      %p113 = scmp.eq.s32.totalorder %s19, 0
      %p114 = por %p112, %p113
      %s115 = ssub.s32 %s13, %s20
      %p116 = scmp.eq.s32.totalorder %s115, 0
      %s118 = sadd.s32 %s117, 1
      %s119 = scalar_select %p116, %s117, %s118
      %p122 = pneg %p116
      %p123 = scmp.eq.s32.totalorder %s13, 1
      %p124 = por %p122, %p123
      %p125 = scmp.ne.s32.totalorder %s117, %s120
      %p126 = scmp.eq.s32.totalorder %s13, 0
      %p127 = por %p125, %p126
      %p128 = scmp.ne.s32.totalorder %s117, %s120
      %p129 = scmp.eq.s32.totalorder %s18, 1
      %p130 = por %p128, %p129
      %p131 = scmp.ne.s32.totalorder %s120, %s121
      %p132 = scmp.eq.s32.totalorder %s18, 0
      %p133 = por %p131, %p132
      %p134 = scmp.ne.s32.totalorder %s120, %s121
      %p135 = scmp.eq.s32.totalorder %s19, 1
      %p136 = por %p134, %p135
      %p138 = scmp.ne.s32.totalorder %s121, %s137
      %p139 = scmp.eq.s32.totalorder %s19, 0
      %p140 = por %p138, %p139
      %p141 = scmp.le.s32.totalorder 1, %s13
      %p142 = scmp.lt.s32.totalorder %s13, 3
      %p143 = pnand %p141, %p142
      %p144 = pneg %p143
      // Predicated region
      $region9: #{tpu_custom_call.1} parent=5 // pred_check
        _
      $region10: #{tpu_custom_call.1} parent=5 // pred_check_branch
        %146 = sbr.rel (%p143) target = $region12
      $region11: #{tpu_custom_call.1} parent=5 // pred_region
        %s147 = ssub.s32 %s13, 1
        // Predicated region
        $region13: #{tpu_custom_call.1} parent=11 // pred_check
          %p148 = pneg %p86
        $region14: #{tpu_custom_call.1} parent=11 // pred_check_branch
          %150 = sbr.rel (%p148) target = $region16
        $region15: #{tpu_custom_call.1} parent=11 // pred_region
          _
        $region16: #{tpu_custom_call.1} parent=11 // pred_fallthru
          _
        // Predicated region
        $region17: #{tpu_custom_call.1} parent=11 // pred_check
          %p151 = pneg %p107
        $region18: #{tpu_custom_call.1} parent=11 // pred_check_branch
          %153 = sbr.rel (%p151) target = $region20
        $region19: #{tpu_custom_call.1} parent=11 // pred_region
          _
        $region20: #{tpu_custom_call.1} parent=11 // pred_fallthru
          _
      $region12: #{tpu_custom_call.1} parent=5 // pred_fallthru
        _
      %p154 = scmp.lt.s32.totalorder %s13, 2
      // Predicated region
      $region21: #{tpu_custom_call.1} parent=5 // pred_check
        %p155 = pneg %p154
      $region22: #{tpu_custom_call.1} parent=5 // pred_check_branch
        %157 = sbr.rel (%p155) target = $region24
      $region23: #{tpu_custom_call.1} parent=5 // pred_region
        // Predicated region
        $region25: #{tpu_custom_call.1} parent=23 // pred_check
          %p158 = pneg %p33
        $region26: #{tpu_custom_call.1} parent=23 // pred_check_branch
          %160 = sbr.rel (%p158) target = $region28
        $region27: #{tpu_custom_call.1} parent=23 // pred_region
          %s161 = smul.u32 4, %s13
          %p162 = scmp.lt.s32.totalorder %s161, 7
          %s163 = scalar_select %p162, %s161, 7
          %s164 = smul.addr %s163, 4
          %s165 = scalar_lea.vmem %s0, %s164
          %s166 = smul.u32 4, %s13
        $region28: #{tpu_custom_call.1} parent=23 // pred_fallthru
          _
        // Predicated region
        $region29: #{tpu_custom_call.1} parent=23 // pred_check
          %p167 = pneg %p59
        $region30: #{tpu_custom_call.1} parent=23 // pred_check_branch
          %169 = sbr.rel (%p167) target = $region32
        $region31: #{tpu_custom_call.1} parent=23 // pred_region
          %s170 = smul.u32 4, %s13
          %p171 = scmp.lt.s32.totalorder %s170, 7
          %s172 = scalar_select %p171, %s170, 7
          %s173 = smul.addr %s172, 4
          %s174 = scalar_lea.vmem %s1, %s173
          %s175 = smul.u32 4, %s13
        $region32: #{tpu_custom_call.1} parent=23 // pred_fallthru
          _
      $region24: #{tpu_custom_call.1} parent=5 // pred_fallthru
        _
      %p176 = scmp.le.s32.totalorder 1, %s13
      %p177 = scmp.lt.s32.totalorder %s13, 3
      %p178 = pnand %p176, %p177
      %p179 = pneg %p178
      // Predicated region
      $region33: #{tpu_custom_call.1} parent=5 // pred_check
        _
      $region34: #{tpu_custom_call.1} parent=5 // pred_check_branch
        %181 = sbr.rel (%p178) target = $region36
      $region35: #{tpu_custom_call.1} parent=5 // pred_region
        %s182 = ssub.s32 %s13, 1
        %s183 = smul.u32 4, %s18
        %p184 = scmp.lt.s32.totalorder %s183, 7
        %s185 = scalar_select %p184, %s183, 7
        %s186 = smul.addr %s185, 4
        %s187 = scalar_lea.vmem %s0, %s186
        %p188 = pneg %p39
        %p189 = pneg %p36
        %s190 = smul.u32 4, %s18
        %p191 = scmp.lt.s32.totalorder %s190, 7
        %s192 = scalar_select %p191, %s190, 7
        %s193 = smul.addr %s192, 4
        %s194 = scalar_lea.vmem %s1, %s193
        %p195 = pneg %p65
        %p196 = pneg %p62
        %p197 = pneg %p86
        %p198 = pneg %p83
        %p199 = pneg %p107
        %p200 = pneg %p104
        %p201 = pneg %p133
        %p202 = pneg %p130
        %s203 = sand.u32 %s120, 1
        %s204 = scalar_lea.sflag [#allocation3], %s203
        %s205 = sand.u32 %s120, 1
        %s206 = smul.addr %s205, 32
        %s207 = scalar_lea.vmem [#allocation2], %s206
        %s208 = smul.u32 4, %s18
        %p209 = scmp.lt.s32.totalorder %s208, 7
        %s210 = scalar_select %p209, %s208, 7
        %s211 = smul.addr %s210, 4
        %s212 = scalar_lea.vmem %s0, %s211
        %s213 = smul.u32 4, %s18
        %s214 = smul.u32 4, %s18
        %p215 = scmp.lt.s32.totalorder %s214, 7
        %s216 = scalar_select %p215, %s214, 7
        %s217 = smul.addr %s216, 4
        %s218 = scalar_lea.vmem %s1, %s217
        %s219 = smul.u32 4, %s18
        %s220 = smul.u32 4, %s18
        %v222 = vld [vmem:[%s218] sm:$0xf]
        %v223 = vld [vmem:[%s218 + $0x4] sm:$0xf]
        %v224 = vld [vmem:[%s218 + $0x8] sm:$0xf]
        %v225 = vld [vmem:[%s218 + $0xc] sm:$0xf]
        %v226 = vld [vmem:[%s212] sm:$0xf]
        %v227 = vld [vmem:[%s212 + $0x4] sm:$0xf]
        %v228 = vld [vmem:[%s212 + $0x8] sm:$0xf]
        %v229 = vld [vmem:[%s212 + $0xc] sm:$0xf]
        %v234 = vunpack.c.l.b16 %v222
        %v235 = vunpack.c.l.b16 %v223
        %v236 = vunpack.c.l.b16 %v224
        %v237 = vunpack.c.l.b16 %v225
        %v238 = vpack.c.b16 %v235, %v234
        %v239 = vpack.c.b16 %v237, %v236
        %v244 = vunpack.c.l.b16 %v226
        %v245 = vunpack.c.l.b16 %v227
        %v246 = vunpack.c.l.b16 %v228
        %v247 = vunpack.c.l.b16 %v229
        %v248 = vpack.c.b16 %v245, %v244
        %v249 = vpack.c.b16 %v247, %v246
        %vm252 = vcmask 261120
        %v254 = vsel %vm252, %v238, 0
        %v257 = vsel %vm252, %v239, 0
        %259 = vmatpush.bf16.msra.mxu0 0
        %260 = vmatpush.bf16.msra.mxu0 0
        %261 = vmatpush.bf16.msra.mxu0 0
        %262 = vmatpush.bf16.msra.mxu0 0
        %263 = vmatpush.bf16.msra.mxu0 0
        %264 = vmatpush.bf16.msra.mxu0 0
        %265 = vmatpush.bf16.msra.mxu0 %v249
        %266 = vmatpush.bf16.msra.mxu0 %v248
        %267 = vmatmul.bf16.gmra.mxu0 %v254
        %v268 = vpop.f32.mrf.mxu0
        %v269 = vadd.f32 0.0, %v268
        %v270 = vpop.f32.mrf.mxu0
        %v271 = vadd.f32 0.0, %v270
        %272 = vmatmul.bf16.gmra.mxu0 %v257
        %v273 = vpop.f32.mrf.mxu0
        %v274 = vadd.f32 0.0, %v273
        %v275 = vpop.f32.mrf.mxu0
        %v276 = vadd.f32 0.0, %v275
        %277 = vdwg.mxu0
        %v278 = vpack.c.bf16 %v271, %v269
        %v279 = vpack.c.bf16 %v276, %v274
        %v280 = vld [vmem:[%s2] sm:$0xf]
        %v281 = vld [vmem:[%s2 + $0x4] sm:$0xf]
        %v282 = vld [vmem:[%s3] sm:$0x1]
        %v284 = vperm.slane %v282, 0
        %v288 = vunpack.c.l.b16 %v280
        %v289 = vunpack.c.l.b16 %v281
        %v290 = vpack.c.b16 %v289, %v288
        %vm292 = vcmask 130048
        %v294 = vsel %vm292, %v278, 0
        %v297 = vsel %vm292, %v279, 0
        %299 = vmatpush.bf16.msra.mxu0 0
        %300 = vmatpush.bf16.msra.mxu0 0
        %301 = vmatpush.bf16.msra.mxu0 0
        %302 = vmatpush.bf16.msra.mxu0 0
        %303 = vmatpush.bf16.msra.mxu0 0
        %304 = vmatpush.bf16.msra.mxu0 0
        %305 = vmatpush.bf16.msra.mxu0 0
        %306 = vmatpush.bf16.msra.mxu0 %v290
        %307 = vmatmul.bf16.gmra.mxu0 %v294
        %v308 = vpop.f32.mrf.mxu0
        %v309 = vadd.f32 %v284, %v308
        %v310 = vpop.f32.mrf.mxu0
        %v311 = vadd.f32 %v284, %v310
        %312 = vmatmul.bf16.gmra.mxu0 %v297
        %v313 = vpop.f32.mrf.mxu0
        %v314 = vadd.f32 %v284, %v313
        %v315 = vpop.f32.mrf.mxu0
        %v316 = vadd.f32 %v284, %v315
        %317 = vdwg.mxu0
        %318 = vst [vmem:[%s207] sm:$0xff] %v309
        %319 = vst [vmem:[%s207 + $0x8] sm:$0xff] %v311
        %320 = vst [vmem:[%s207 + $0x10] sm:$0xff] %v314
        %321 = vst [vmem:[%s207 + $0x18] sm:$0xff] %v316
        %s322 = sand.u32 %s120, 1
        %s323 = scalar_lea.sflag [#allocation3], %s322
        %s324 = sand.u32 %s120, 1
        %s325 = smul.addr %s324, 32
        %s326 = scalar_lea.vmem [#allocation2], %s325
        // Predicated region
        $region37: #{tpu_custom_call.1} parent=35 // pred_check
          %p327 = pneg %p130
        $region38: #{tpu_custom_call.1} parent=35 // pred_check_branch
          %329 = sbr.rel (%p327) target = $region40
        $region39: #{tpu_custom_call.1} parent=35 // pred_region
          %s330 = smul.u32 4, %s18
          %332 = vsyncadd %s323, 0
          %s333 = smul.addr %s330, 8
          %s334 = scalar_lea.hbm %s4, %s333
          %s335 = sshll.u32 %s326, 4
          %s336 = int_to_ptr.vmem [resolvable:$true] %s335
          %s337 = sshll.u32 %s334, 4
          %s338 = int_to_ptr.hbm [resolvable:$true] %s337
          %343 = dma.vmem_to_hbm [thread:$0]  %s336, 512, %s338, %s323, 128, 128, 8
        $region40: #{tpu_custom_call.1} parent=35 // pred_fallthru
          _
      $region36: #{tpu_custom_call.1} parent=5 // pred_fallthru
        _
      %p344 = scmp.le.s32.totalorder 2, %s13
      // Predicated region
      $region41: #{tpu_custom_call.1} parent=5 // pred_check
        %p345 = pneg %p344
      $region42: #{tpu_custom_call.1} parent=5 // pred_check_branch
        %347 = sbr.rel (%p345) target = $region44
      $region43: #{tpu_custom_call.1} parent=5 // pred_region
        %s348 = ssub.s32 %s13, 2
        // Predicated region
        $region45: #{tpu_custom_call.1} parent=43 // pred_check
          %p349 = pneg %p136
        $region46: #{tpu_custom_call.1} parent=43 // pred_check_branch
          %351 = sbr.rel (%p349) target = $region48
        $region47: #{tpu_custom_call.1} parent=43 // pred_region
          %s352 = sand.u32 %s121, 1
          %s353 = scalar_lea.sflag [#allocation3], %s352
          %s354 = sand.u32 %s121, 1
          %s355 = smul.addr %s354, 32
          %s356 = scalar_lea.vmem [#allocation2], %s355
          %358 = dma.done %s353, 512
        $region48: #{tpu_custom_call.1} parent=43 // pred_fallthru
          _
      $region44: #{tpu_custom_call.1} parent=5 // pred_fallthru
        _
    $region6: #{tpu_custom_call.1} parent=1 // loop_footer
      %s17 = sadd.s32 1, %s13
    $region7: #{tpu_custom_call.1} parent=1 // loop_footer_branch
      %12 = sbr.rel target = $region3
    $region8: #{tpu_custom_call.1} parent=1 // loop_exit
      _
    %359 = vsyncpa [#allocation3], 1
    %s360 = scalar_lea.sflag [#allocation3], 1
    %361 = vsyncpa %s360, 1

</llo_original>
